<compile_context>
chip_gen: v7x
topology: tpu7x:2x2x1
jax: 0.10.0
libtpu: 0.0.40
codegen_flags: <defaults>
</compile_context>

<pallas_src>
import math

import jax
import jax.numpy as jnp
from jax.experimental import pallas as pl
from jax.experimental.pallas import tpu as pltpu

_LN_EPS = 1e-5  # nn.LayerNorm default


def adaptformer_kernel(x_ref, lnw_ref, lnb_ref, wd_ref, bd_ref, wu_ref,
                       bus_ref, s_ref, o_ref):
    # x_ref:  (tm, in_dim)          lnw_ref/lnb_ref: (1, in_dim) f32
    # wd_ref: (in_dim, bottle_p)    bd_ref: (1, bottle_p) f32
    # wu_ref: (bottle_p, in_dim)    bus_ref: (1, in_dim) f32   (= b_up * scaling)
    # s_ref:  (1,) f32 in SMEM      o_ref: (tm, in_dim)
    x = x_ref[...].astype(jnp.float32)
    inv_n = 1.0 / x_ref.shape[-1]

    # --- one-pass LayerNorm over the feature axis (f32 math) ---
    sum_x = jnp.sum(x, axis=-1, keepdims=True)
    sum_xx = jnp.sum(x * x, axis=-1, keepdims=True)
    mean = sum_x * inv_n
    var = jnp.maximum(sum_xx * inv_n - mean * mean, 0.0)  # clamp f32 cancellation
    inv = jax.lax.rsqrt(var + _LN_EPS)
    xn = (x - mean) * inv * lnw_ref[...] + lnb_ref[...]

    # --- down projection + bias + ReLU (weight dtype on MXU, f32 accumulate) ---
    h = jnp.dot(xn.astype(wd_ref.dtype), wd_ref[...],
                preferred_element_type=jnp.float32)
    h = jnp.maximum(h + bd_ref[...], 0.0)
    # Apply the learned scaling on the narrow (tm, bottle) tile instead of the
    # full-width output; b_up was pre-scaled in the wrapper.
    h = h * s_ref[0]

    # --- up projection + (pre-scaled) bias ---
    y = jnp.dot(h.astype(wu_ref.dtype), wu_ref[...],
                preferred_element_type=jnp.float32)
    o_ref[...] = (y + bus_ref[...]).astype(o_ref.dtype)


def _round_up(x, m):
    return ((x + m - 1) // m) * m


def _vmem_budget():
    """Generation-aware scoped-VMEM limit + tile-sizing budget (bytes)."""
    try:
        phys = pltpu.get_tpu_info().vmem_capacity_bytes
    except Exception:  # query unavailable (e.g. interpret mode): be conservative
        phys = 64 * 1024 * 1024
    # Request 3/4 of physical VMEM, capped at 64 MiB:
    #   v5e/v6e (128 MiB physical) -> 64 MiB,  v7x (64 MiB per TC) -> 48 MiB.
    limit = min((3 * phys) // 4, 64 * 1024 * 1024)
    # Size tiles against the limit minus ~8 MiB headroom (compiler temps,
    # semaphores, possible fallback double-buffering of the small weights).
    budget = max(limit - 8 * 1024 * 1024, 8 * 1024 * 1024)
    return limit, budget


def _choose_tm(M, in_dim, bottle_p, x_bytes, out_bytes, w_bytes, budget_bytes):
    """Pick the row-tile size: as big as VMEM allows, but never a 1-step grid."""
    # Invariant operands are single-buffered (pl.Buffered(1)): count them once.
    weight_bytes = 2 * in_dim * bottle_p * w_bytes + (3 * in_dim + bottle_p) * 4
    avail = max(budget_bytes - weight_bytes, 1 << 20)
    # Per row: double-buffered x/y tiles + ~3 live f32 intermediates
    # (x_f32, xn, y) over in_dim + the f32 h tile over bottle_p.
    per_row = in_dim * (2 * (x_bytes + out_bytes) + 12) + 4 * bottle_p
    tm = int(avail // per_row)

    # Sublane multiple for the activation dtype (f32->8, bf16->16, i8/fp8->32).
    sub = 8 * max(1, 4 // max(1, x_bytes))

    # Keep >= ~4 grid steps (>= 2 whenever M allows) so both v7x TensorCores
    # get work and input/output DMAs overlap with compute.
    min_steps = 4
    step_cap = max(sub, (M // min_steps // sub) * sub)
    tm = min(tm, step_cap)
    tm = max(sub, (tm // sub) * sub)
    if tm >= M:
        return M  # full extent: single block, no (8,128) divisibility needed
    return tm


def adaptformer_forward(x, ln_w, ln_b, w_down, b_down, w_up, b_up, scaling, *,
                        tm=None):
    """Fused AdaptFormer forward.

    ln_w, ln_b, b_up: (in_dim,)    b_down: (bottle_dim,)
    w_down: (in_dim, bottle_dim)   w_up: (bottle_dim, in_dim)  (== PyTorch weight.T)
    scaling: (1,) scalar parameter.
    """
    orig_shape = x.shape
    in_dim = orig_shape[-1]
    M = int(math.prod(orig_shape[:-1]))
    bottle_dim = w_down.shape[1]

    # --- lane-densify the bottleneck: zero-pad to a multiple of 128 (exact) ---
    bottle_p = _round_up(bottle_dim, 128)
    if bottle_p != bottle_dim:
        pad = bottle_p - bottle_dim
        w_down = jnp.pad(w_down, ((0, 0), (0, pad)))
        b_down = jnp.pad(b_down, ((0, pad),))
        w_up = jnp.pad(w_up, ((0, pad), (0, 0)))

    x2 = x.reshape(M, in_dim)
    # Pre-cast the tiny per-channel params to f32 (no per-step conversions).
    ln_w2 = ln_w.reshape(1, in_dim).astype(jnp.float32)
    ln_b2 = ln_b.reshape(1, in_dim).astype(jnp.float32)
    b_down2 = b_down.reshape(1, bottle_p).astype(jnp.float32)
    scaling1 = scaling.reshape(1).astype(jnp.float32)
    # Fold the scaling into b_up once (the kernel scales h, not y).
    b_up_s2 = (b_up.astype(jnp.float32) * scaling1[0]).reshape(1, in_dim)

    x_bytes = x2.dtype.itemsize
    out_bytes = x2.dtype.itemsize
    w_bytes = w_down.dtype.itemsize

    vmem_limit, budget = _vmem_budget()
    if tm is None:
        tm = _choose_tm(M, in_dim, bottle_p, x_bytes, out_bytes, w_bytes, budget)
    grid = (pl.cdiv(M, tm),)

    param_bytes = (2 * in_dim * bottle_p) * w_bytes + (3 * in_dim + bottle_p + 1) * 4
    cost = pl.CostEstimate(
        flops=4 * M * in_dim * bottle_p + 8 * M * in_dim,
        transcendentals=M,  # one rsqrt per row
        bytes_accessed=M * in_dim * (x_bytes + out_bytes) + param_bytes,
    )

    def _in_specs(single_buffer_consts):
        kw = {"pipeline_mode": pl.Buffered(1)} if single_buffer_consts else {}

        def const(shape):
            return pl.BlockSpec(shape, lambda i: (0, 0), **kw)

        return [
            pl.BlockSpec((tm, in_dim), lambda i: (i, 0)),       # x row tile
            const((1, in_dim)),                                 # LN gamma (f32)
            const((1, in_dim)),                                 # LN beta  (f32)
            const((in_dim, bottle_p)),                          # W_down
            const((1, bottle_p)),                               # b_down (f32)
            const((bottle_p, in_dim)),                          # W_up
            const((1, in_dim)),                                 # b_up * scaling (f32)
            pl.BlockSpec(memory_space=pltpu.MemorySpace.SMEM),  # scaling scalar
        ]

    def _call(single_buffer_consts):
        return pl.pallas_call(
            adaptformer_kernel,
            out_shape=jax.ShapeDtypeStruct((M, in_dim), x.dtype),
            grid_spec=pltpu.PrefetchScalarGridSpec(
                num_scalar_prefetch=0,
                grid=grid,
                in_specs=_in_specs(single_buffer_consts),
                out_specs=pl.BlockSpec((tm, in_dim), lambda i: (i, 0)),
            ),
            compiler_params=pltpu.CompilerParams(
                dimension_semantics=("parallel",),
                vmem_limit_bytes=vmem_limit,
            ),
            cost_estimate=cost,
        )(x2, ln_w2, ln_b2, w_down, b_down2, w_up, b_up_s2, scaling1)

    try:
        out = _call(True)
    except Exception:
        # Fallback for toolchains without pipeline_mode support on BlockSpec:
        # identical kernel, default double-buffering of the invariant operands.
        out = _call(False)

    return out.reshape(*orig_shape[:-1], in_dim)


def adaptformer_reference(x, ln_w, ln_b, w_down, b_down, w_up, b_up, scaling):
    xf = x.astype(jnp.float32)
    mu = jnp.mean(xf, axis=-1, keepdims=True)
    var = jnp.mean((xf - mu) ** 2, axis=-1, keepdims=True)
    xn = (xf - mu) / jnp.sqrt(var + _LN_EPS) * ln_w + ln_b
    h = jnp.maximum(xn @ w_down + b_down, 0.0)
    y = h @ w_up + b_up
    return (y * scaling[0]).astype(x.dtype)


if __name__ == "__main__":
    # Small, deterministic synthetic configuration.
    batch, seq = 2, 8
    in_dim, bottle_dim, alpha = 32, 8, 1.0

    key = jax.random.PRNGKey(0)
    kx, klw, klb, kwd, kbd, kwu, kbu = jax.random.split(key, 7)

    x = jax.random.normal(kx, (batch, seq, in_dim), dtype=jnp.float32)

    # Parameters (JAX layout: W is the transpose of PyTorch nn.Linear.weight).
    # NOTE: the module zero-inits up_proj weight and both biases (output would be
    # trivially zero); we use small deterministic random values so the fused
    # kernel path (LN, both matmuls, ReLU, biases, scaling) is exercised.
    ln_w = 1.0 + 0.05 * jax.random.normal(klw, (in_dim,), dtype=jnp.float32)
    ln_b = 0.02 * jax.random.normal(klb, (in_dim,), dtype=jnp.float32)
    w_down = 0.1 * jax.random.normal(kwd, (in_dim, bottle_dim), dtype=jnp.float32)
    b_down = 0.01 * jax.random.normal(kbd, (bottle_dim,), dtype=jnp.float32)
    w_up = 0.05 * jax.random.normal(kwu, (bottle_dim, in_dim), dtype=jnp.float32)
    b_up = 0.01 * jax.random.normal(kbu, (in_dim,), dtype=jnp.float32)
    scaling = jnp.array([alpha / bottle_dim], dtype=jnp.float32)

    y = adaptformer_forward(x, ln_w, ln_b, w_down, b_down, w_up, b_up, scaling)
    y = jax.block_until_ready(y)

    y_ref = adaptformer_reference(x, ln_w, ln_b, w_down, b_down, w_up, b_up, scaling)

    assert y.shape == (batch, seq, in_dim), y.shape
    assert jnp.allclose(y, y_ref, atol=1e-4, rtol=1e-4), "mismatch vs reference"

    print("KERNEL_OK")
</pallas_src>

<mosaic_0001>
module attributes {stable_mosaic.version = 11 : i64} {
  func.func @adaptformer_kernel(%arg0: i32, %arg1: memref<8x32xf32, #tpu.memory_space<vmem>>, %arg2: memref<1x32xf32, #tpu.memory_space<vmem>>, %arg3: memref<1x32xf32, #tpu.memory_space<vmem>>, %arg4: memref<32x128xf32, #tpu.memory_space<vmem>>, %arg5: memref<1x128xf32, #tpu.memory_space<vmem>>, %arg6: memref<128x32xf32, #tpu.memory_space<vmem>>, %arg7: memref<1x32xf32, #tpu.memory_space<vmem>>, %arg8: memref<1xf32, #tpu.memory_space<smem>>, %arg9: memref<8x32xf32, #tpu.memory_space<vmem>>) attributes {dimension_semantics = [#tpu.dimension_semantics<parallel>], iteration_bounds = array<i64: 2>, scalar_prefetch = 0 : i64, scratch_operands = 0 : i64, tpu.core_type = #tpu.core_type<tc>, window_params = [{transform_indices = @transform_0, window_bounds = array<i64: 8, 32>}, {pipeline_mode = #tpu.pipeline_mode<synchronous>, transform_indices = @transform_1, window_bounds = array<i64: 1, 32>}, {pipeline_mode = #tpu.pipeline_mode<synchronous>, transform_indices = @transform_2, window_bounds = array<i64: 1, 32>}, {pipeline_mode = #tpu.pipeline_mode<synchronous>, transform_indices = @transform_3, window_bounds = array<i64: 32, 128>}, {pipeline_mode = #tpu.pipeline_mode<synchronous>, transform_indices = @transform_4, window_bounds = array<i64: 1, 128>}, {pipeline_mode = #tpu.pipeline_mode<synchronous>, transform_indices = @transform_5, window_bounds = array<i64: 128, 32>}, {pipeline_mode = #tpu.pipeline_mode<synchronous>, transform_indices = @transform_6, window_bounds = array<i64: 1, 32>}, {transform_indices = @transform_7, window_bounds = array<i64: 1>}, {transform_indices = @transform_8, window_bounds = array<i64: 8, 32>}]} {
    %c0 = arith.constant 0 : index
    %c0_0 = arith.constant 0 : index
    %0 = vector.load %arg1[%c0, %c0_0] : memref<8x32xf32, #tpu.memory_space<vmem>>, vector<8x32xf32>
    %cst = arith.constant dense<0.000000e+00> : vector<8xf32>
    %1 = vector.multi_reduction <add>, %0, %cst [1] : vector<8x32xf32> to vector<8xf32>
    %2 = vector.shape_cast %1 : vector<8xf32> to vector<8x1xf32>
    %3 = arith.mulf %0, %0 : vector<8x32xf32>
    %cst_1 = arith.constant dense<0.000000e+00> : vector<8xf32>
    %4 = vector.multi_reduction <add>, %3, %cst_1 [1] : vector<8x32xf32> to vector<8xf32>
    %5 = vector.shape_cast %4 : vector<8xf32> to vector<8x1xf32>
    %cst_2 = arith.constant 3.125000e-02 : f32
    %6 = vector.broadcast %cst_2 : f32 to vector<8x1xf32>
    %7 = arith.mulf %2, %6 : vector<8x1xf32>
    %cst_3 = arith.constant 3.125000e-02 : f32
    %8 = vector.broadcast %cst_3 : f32 to vector<8x1xf32>
    %9 = arith.mulf %5, %8 : vector<8x1xf32>
    %10 = arith.mulf %7, %7 : vector<8x1xf32>
    %11 = arith.subf %9, %10 : vector<8x1xf32>
    %cst_4 = arith.constant 0.000000e+00 : f32
    %12 = vector.broadcast %cst_4 : f32 to vector<8x1xf32>
    %13 = arith.maximumf %11, %12 : vector<8x1xf32>
    %cst_5 = arith.constant 9.99999974E-6 : f32
    %14 = vector.broadcast %cst_5 : f32 to vector<8x1xf32>
    %15 = arith.addf %13, %14 : vector<8x1xf32>
    %16 = math.rsqrt %15 : vector<8x1xf32>
    %17 = vector.broadcast %7 : vector<8x1xf32> to vector<8x32xf32>
    %18 = arith.subf %0, %17 : vector<8x32xf32>
    %19 = vector.broadcast %16 : vector<8x1xf32> to vector<8x32xf32>
    %20 = arith.mulf %18, %19 : vector<8x32xf32>
    %c0_6 = arith.constant 0 : index
    %c0_7 = arith.constant 0 : index
    %21 = vector.load %arg2[%c0_6, %c0_7] : memref<1x32xf32, #tpu.memory_space<vmem>>, vector<1x32xf32>
    %22 = vector.broadcast %21 : vector<1x32xf32> to vector<8x32xf32>
    %23 = arith.mulf %20, %22 : vector<8x32xf32>
    %c0_8 = arith.constant 0 : index
    %c0_9 = arith.constant 0 : index
    %24 = vector.load %arg3[%c0_8, %c0_9] : memref<1x32xf32, #tpu.memory_space<vmem>>, vector<1x32xf32>
    %25 = vector.broadcast %24 : vector<1x32xf32> to vector<8x32xf32>
    %26 = arith.addf %23, %25 : vector<8x32xf32>
    %c0_10 = arith.constant 0 : index
    %c0_11 = arith.constant 0 : index
    %27 = vector.load %arg4[%c0_10, %c0_11] : memref<32x128xf32, #tpu.memory_space<vmem>>, vector<32x128xf32>
    %cst_12 = arith.constant dense<0.000000e+00> : vector<8x128xf32>
    %28 = tpu.matmul %26, %27, %cst_12 {dimension_numbers = #tpu.dot_dimension_numbers<[1], [0], [0], [1], [0, 0, 1, 1], [], []>} : vector<8x32xf32>, vector<32x128xf32>, vector<8x128xf32> -> vector<8x128xf32>
    %c0_13 = arith.constant 0 : index
    %c0_14 = arith.constant 0 : index
    %29 = vector.load %arg5[%c0_13, %c0_14] : memref<1x128xf32, #tpu.memory_space<vmem>>, vector<1x128xf32>
    %30 = vector.broadcast %29 : vector<1x128xf32> to vector<8x128xf32>
    %31 = arith.addf %28, %30 : vector<8x128xf32>
    %cst_15 = arith.constant 0.000000e+00 : f32
    %32 = vector.broadcast %cst_15 : f32 to vector<8x128xf32>
    %33 = arith.maximumf %31, %32 : vector<8x128xf32>
    %c0_16 = arith.constant 0 : index
    %34 = memref.load %arg8[%c0_16] : memref<1xf32, #tpu.memory_space<smem>>
    %35 = vector.broadcast %34 : f32 to vector<8x128xf32>
    %36 = arith.mulf %33, %35 : vector<8x128xf32>
    %c0_17 = arith.constant 0 : index
    %c0_18 = arith.constant 0 : index
    %37 = vector.load %arg6[%c0_17, %c0_18] : memref<128x32xf32, #tpu.memory_space<vmem>>, vector<128x32xf32>
    %cst_19 = arith.constant dense<0.000000e+00> : vector<8x32xf32>
    %38 = tpu.matmul %36, %37, %cst_19 {dimension_numbers = #tpu.dot_dimension_numbers<[1], [0], [0], [1], [0, 0, 1, 1], [], []>} : vector<8x128xf32>, vector<128x32xf32>, vector<8x32xf32> -> vector<8x32xf32>
    %c0_20 = arith.constant 0 : index
    %c0_21 = arith.constant 0 : index
    %39 = vector.load %arg7[%c0_20, %c0_21] : memref<1x32xf32, #tpu.memory_space<vmem>>, vector<1x32xf32>
    %40 = vector.broadcast %39 : vector<1x32xf32> to vector<8x32xf32>
    %41 = arith.addf %38, %40 : vector<8x32xf32>
    %c0_22 = arith.constant 0 : index
    %c0_23 = arith.constant 0 : index
    %42 = vector.load %arg9[%c0_22, %c0_23] : memref<8x32xf32, #tpu.memory_space<vmem>>, vector<8x32xf32>
    tpu.vector_store %arg9[%c0_22, %c0_23], %41 {strides = array<i32>} : memref<8x32xf32, #tpu.memory_space<vmem>>, vector<8x32xf32>,
    return
  }
  func.func @transform_0(%arg0: i32) -> (i32, i32) {
    %c0_i32 = arith.constant 0 : i32
    %c0_i32_0 = arith.constant 0 : i32
    return %arg0, %c0_i32 : i32, i32
  }
  func.func @transform_1(%arg0: i32) -> (i32, i32) {
    %c0_i32 = arith.constant 0 : i32
    %c0_i32_0 = arith.constant 0 : i32
    %c0_i32_1 = arith.constant 0 : i32
    return %c0_i32, %c0_i32_0 : i32, i32
  }
  func.func @transform_2(%arg0: i32) -> (i32, i32) {
    %c0_i32 = arith.constant 0 : i32
    %c0_i32_0 = arith.constant 0 : i32
    %c0_i32_1 = arith.constant 0 : i32
    return %c0_i32, %c0_i32_0 : i32, i32
  }
  func.func @transform_3(%arg0: i32) -> (i32, i32) {
    %c0_i32 = arith.constant 0 : i32
    %c0_i32_0 = arith.constant 0 : i32
    %c0_i32_1 = arith.constant 0 : i32
    return %c0_i32, %c0_i32_0 : i32, i32
  }
  func.func @transform_4(%arg0: i32) -> (i32, i32) {
    %c0_i32 = arith.constant 0 : i32
    %c0_i32_0 = arith.constant 0 : i32
    %c0_i32_1 = arith.constant 0 : i32
    return %c0_i32, %c0_i32_0 : i32, i32
  }
  func.func @transform_5(%arg0: i32) -> (i32, i32) {
    %c0_i32 = arith.constant 0 : i32
    %c0_i32_0 = arith.constant 0 : i32
    %c0_i32_1 = arith.constant 0 : i32
    return %c0_i32, %c0_i32_0 : i32, i32
  }
  func.func @transform_6(%arg0: i32) -> (i32, i32) {
    %c0_i32 = arith.constant 0 : i32
    %c0_i32_0 = arith.constant 0 : i32
    %c0_i32_1 = arith.constant 0 : i32
    return %c0_i32, %c0_i32_0 : i32, i32
  }
  func.func @transform_7(%arg0: i32) -> i32 {
    %c0_i32 = arith.constant 0 : i32
    %c0_i32_0 = arith.constant 0 : i32
    return %c0_i32 : i32
  }
  func.func @transform_8(%arg0: i32) -> (i32, i32) {
    %c0_i32 = arith.constant 0 : i32
    %c0_i32_0 = arith.constant 0 : i32
    return %arg0, %c0_i32 : i32, i32
  }
}

module attributes {stable_mosaic.version = 11 : i64} {
  func.func @adaptformer_kernel(%arg0: i32, %arg1: memref<8x32xf32, #tpu.memory_space<vmem>>, %arg2: memref<1x32xf32, #tpu.memory_space<vmem>>, %arg3: memref<1x32xf32, #tpu.memory_space<vmem>>, %arg4: memref<32x128xf32, #tpu.memory_space<vmem>>, %arg5: memref<1x128xf32, #tpu.memory_space<vmem>>, %arg6: memref<128x32xf32, #tpu.memory_space<vmem>>, %arg7: memref<1x32xf32, #tpu.memory_space<vmem>>, %arg8: memref<1xf32, #tpu.memory_space<smem>>, %arg9: memref<8x32xf32, #tpu.memory_space<vmem>>) attributes {dimension_semantics = [#tpu.dimension_semantics<parallel>], iteration_bounds = array<i64: 2>, scalar_prefetch = 0 : i64, scratch_operands = 0 : i64, tpu.core_type = #tpu.core_type<tc>, window_params = [{transform_indices = @transform_0, window_bounds = array<i64: 8, 32>}, {pipeline_mode = #tpu.pipeline_mode<synchronous>, transform_indices = @transform_1, window_bounds = array<i64: 1, 32>}, {pipeline_mode = #tpu.pipeline_mode<synchronous>, transform_indices = @transform_2, window_bounds = array<i64: 1, 32>}, {pipeline_mode = #tpu.pipeline_mode<synchronous>, transform_indices = @transform_3, window_bounds = array<i64: 32, 128>}, {pipeline_mode = #tpu.pipeline_mode<synchronous>, transform_indices = @transform_4, window_bounds = array<i64: 1, 128>}, {pipeline_mode = #tpu.pipeline_mode<synchronous>, transform_indices = @transform_5, window_bounds = array<i64: 128, 32>}, {pipeline_mode = #tpu.pipeline_mode<synchronous>, transform_indices = @transform_6, window_bounds = array<i64: 1, 32>}, {transform_indices = @transform_7, window_bounds = array<i64: 1>}, {transform_indices = @transform_8, window_bounds = array<i64: 8, 32>}]} {
    %c0 = arith.constant 0 : index
    %c0_0 = arith.constant 0 : index
    %0 = vector.load %arg1[%c0, %c0_0] : memref<8x32xf32, #tpu.memory_space<vmem>>, vector<8x32xf32>
    %cst = arith.constant dense<0.000000e+00> : vector<8xf32>
    %1 = vector.multi_reduction <add>, %0, %cst [1] : vector<8x32xf32> to vector<8xf32>
    %2 = vector.shape_cast %1 : vector<8xf32> to vector<8x1xf32>
    %3 = arith.mulf %0, %0 : vector<8x32xf32>
    %cst_1 = arith.constant dense<0.000000e+00> : vector<8xf32>
    %4 = vector.multi_reduction <add>, %3, %cst_1 [1] : vector<8x32xf32> to vector<8xf32>
    %5 = vector.shape_cast %4 : vector<8xf32> to vector<8x1xf32>
    %cst_2 = arith.constant 3.125000e-02 : f32
    %6 = vector.broadcast %cst_2 : f32 to vector<8x1xf32>
    %7 = arith.mulf %2, %6 : vector<8x1xf32>
    %cst_3 = arith.constant 3.125000e-02 : f32
    %8 = vector.broadcast %cst_3 : f32 to vector<8x1xf32>
    %9 = arith.mulf %5, %8 : vector<8x1xf32>
    %10 = arith.mulf %7, %7 : vector<8x1xf32>
    %11 = arith.subf %9, %10 : vector<8x1xf32>
    %cst_4 = arith.constant 0.000000e+00 : f32
    %12 = vector.broadcast %cst_4 : f32 to vector<8x1xf32>
    %13 = arith.maximumf %11, %12 : vector<8x1xf32>
    %cst_5 = arith.constant 9.99999974E-6 : f32
    %14 = vector.broadcast %cst_5 : f32 to vector<8x1xf32>
    %15 = arith.addf %13, %14 : vector<8x1xf32>
    %16 = math.rsqrt %15 : vector<8x1xf32>
    %17 = vector.broadcast %7 : vector<8x1xf32> to vector<8x32xf32>
    %18 = arith.subf %0, %17 : vector<8x32xf32>
    %19 = vector.broadcast %16 : vector<8x1xf32> to vector<8x32xf32>
    %20 = arith.mulf %18, %19 : vector<8x32xf32>
    %c0_6 = arith.constant 0 : index
    %c0_7 = arith.constant 0 : index
    %21 = vector.load %arg2[%c0_6, %c0_7] : memref<1x32xf32, #tpu.memory_space<vmem>>, vector<1x32xf32>
    %22 = vector.broadcast %21 : vector<1x32xf32> to vector<8x32xf32>
    %23 = arith.mulf %20, %22 : vector<8x32xf32>
    %c0_8 = arith.constant 0 : index
    %c0_9 = arith.constant 0 : index
    %24 = vector.load %arg3[%c0_8, %c0_9] : memref<1x32xf32, #tpu.memory_space<vmem>>, vector<1x32xf32>
    %25 = vector.broadcast %24 : vector<1x32xf32> to vector<8x32xf32>
    %26 = arith.addf %23, %25 : vector<8x32xf32>
    %c0_10 = arith.constant 0 : index
    %c0_11 = arith.constant 0 : index
    %27 = vector.load %arg4[%c0_10, %c0_11] : memref<32x128xf32, #tpu.memory_space<vmem>>, vector<32x128xf32>
    %cst_12 = arith.constant dense<0.000000e+00> : vector<8x128xf32>
    %28 = tpu.matmul %26, %27, %cst_12 {dimension_numbers = #tpu.dot_dimension_numbers<[1], [0], [0], [1], [0, 0, 1, 1], [], []>} : vector<8x32xf32>, vector<32x128xf32>, vector<8x128xf32> -> vector<8x128xf32>
    %c0_13 = arith.constant 0 : index
    %c0_14 = arith.constant 0 : index
    %29 = vector.load %arg5[%c0_13, %c0_14] : memref<1x128xf32, #tpu.memory_space<vmem>>, vector<1x128xf32>
    %30 = vector.broadcast %29 : vector<1x128xf32> to vector<8x128xf32>
    %31 = arith.addf %28, %30 : vector<8x128xf32>
    %cst_15 = arith.constant 0.000000e+00 : f32
    %32 = vector.broadcast %cst_15 : f32 to vector<8x128xf32>
    %33 = arith.maximumf %31, %32 : vector<8x128xf32>
    %c0_16 = arith.constant 0 : index
    %34 = memref.load %arg8[%c0_16] : memref<1xf32, #tpu.memory_space<smem>>
    %35 = vector.broadcast %34 : f32 to vector<8x128xf32>
    %36 = arith.mulf %33, %35 : vector<8x128xf32>
    %c0_17 = arith.constant 0 : index
    %c0_18 = arith.constant 0 : index
    %37 = vector.load %arg6[%c0_17, %c0_18] : memref<128x32xf32, #tpu.memory_space<vmem>>, vector<128x32xf32>
    %cst_19 = arith.constant dense<0.000000e+00> : vector<8x32xf32>
    %38 = tpu.matmul %36, %37, %cst_19 {dimension_numbers = #tpu.dot_dimension_numbers<[1], [0], [0], [1], [0, 0, 1, 1], [], []>} : vector<8x128xf32>, vector<128x32xf32>, vector<8x32xf32> -> vector<8x32xf32>
    %c0_20 = arith.constant 0 : index
    %c0_21 = arith.constant 0 : index
    %39 = vector.load %arg7[%c0_20, %c0_21] : memref<1x32xf32, #tpu.memory_space<vmem>>, vector<1x32xf32>
    %40 = vector.broadcast %39 : vector<1x32xf32> to vector<8x32xf32>
    %41 = arith.addf %38, %40 : vector<8x32xf32>
    %c0_22 = arith.constant 0 : index
    %c0_23 = arith.constant 0 : index
    %42 = vector.load %arg9[%c0_22, %c0_23] : memref<8x32xf32, #tpu.memory_space<vmem>>, vector<8x32xf32>
    tpu.vector_store %arg9[%c0_22, %c0_23], %41 {strides = array<i32>} : memref<8x32xf32, #tpu.memory_space<vmem>>, vector<8x32xf32>,
    return
  }
  func.func @transform_0(%arg0: i32) -> (i32, i32) {
    %c0_i32 = arith.constant 0 : i32
    %c0_i32_0 = arith.constant 0 : i32
    return %arg0, %c0_i32 : i32, i32
  }
  func.func @transform_1(%arg0: i32) -> (i32, i32) {
    %c0_i32 = arith.constant 0 : i32
    %c0_i32_0 = arith.constant 0 : i32
    %c0_i32_1 = arith.constant 0 : i32
    return %c0_i32, %c0_i32_0 : i32, i32
  }
  func.func @transform_2(%arg0: i32) -> (i32, i32) {
    %c0_i32 = arith.constant 0 : i32
    %c0_i32_0 = arith.constant 0 : i32
    %c0_i32_1 = arith.constant 0 : i32
    return %c0_i32, %c0_i32_0 : i32, i32
  }
  func.func @transform_3(%arg0: i32) -> (i32, i32) {
    %c0_i32 = arith.constant 0 : i32
    %c0_i32_0 = arith.constant 0 : i32
    %c0_i32_1 = arith.constant 0 : i32
    return %c0_i32, %c0_i32_0 : i32, i32
  }
  func.func @transform_4(%arg0: i32) -> (i32, i32) {
    %c0_i32 = arith.constant 0 : i32
    %c0_i32_0 = arith.constant 0 : i32
    %c0_i32_1 = arith.constant 0 : i32
    return %c0_i32, %c0_i32_0 : i32, i32
  }
  func.func @transform_5(%arg0: i32) -> (i32, i32) {
    %c0_i32 = arith.constant 0 : i32
    %c0_i32_0 = arith.constant 0 : i32
    %c0_i32_1 = arith.constant 0 : i32
    return %c0_i32, %c0_i32_0 : i32, i32
  }
  func.func @transform_6(%arg0: i32) -> (i32, i32) {
    %c0_i32 = arith.constant 0 : i32
    %c0_i32_0 = arith.constant 0 : i32
    %c0_i32_1 = arith.constant 0 : i32
    return %c0_i32, %c0_i32_0 : i32, i32
  }
  func.func @transform_7(%arg0: i32) -> i32 {
    %c0_i32 = arith.constant 0 : i32
    %c0_i32_0 = arith.constant 0 : i32
    return %c0_i32 : i32
  }
  func.func @transform_8(%arg0: i32) -> (i32, i32) {
    %c0_i32 = arith.constant 0 : i32
    %c0_i32_0 = arith.constant 0 : i32
    return %arg0, %c0_i32 : i32, i32
  }
}

</mosaic_0001>

<llo_original>
// kernel: tpu_custom_call.1
$region0: #{tpu_custom_call.1}
  #allocation0 [shape = 'u32[]', space=smem, size = 0x4, offset = 0x4, fixed_abs, tag = 'smem constant byte address 0x4 - core index']
  #allocation1 [shape = 'u32[144,128]{1,0:T(1,128)}', space=vmem, size = 0x12000, scoped, tag = 'internal scratch']
  #allocation2 [shape = 'f32[1]{0:T(128)S(6)}', space=smem, size = 0x200, scoped, tag = 'scoped memory for tpu_custom_call.1']
  %s0 = inlined_call_operand.vmem [shape: f32[16,32], index: 0, kind: input, shape index: {}]
  %s1 = inlined_call_operand.vmem [shape: f32[1,32], index: 1, kind: input, shape index: {}]
  %s2 = inlined_call_operand.vmem [shape: f32[1,32], index: 2, kind: input, shape index: {}]
  %s3 = inlined_call_operand.vmem [shape: f32[32,128], index: 3, kind: input, shape index: {}]
  %s4 = inlined_call_operand.vmem [shape: f32[1,128], index: 4, kind: input, shape index: {}]
  %s5 = inlined_call_operand.vmem [shape: f32[128,32], index: 5, kind: input, shape index: {}]
  %s6 = inlined_call_operand.vmem [shape: f32[1,32], index: 6, kind: input, shape index: {}]
  %s7 = inlined_call_operand.<no memory space> [shape: f32[1], index: 7, kind: input, shape index: {}]
  %s8 = inlined_call_operand.hbm [shape: f32[16,32], index: 8, kind: output, shape index: {}]
  %s9 = sld [smem:[#allocation0]]
  $region65: #{tpu_custom_call.1} parent=0
    _
  %s11 = ssub.s32 1, %s9
  %s12 = scalar_select 0, %s11, %s9
  %13 = sst [smem:[#allocation2]] %s7
  $region1: #{tpu_custom_call.1} parent=0
    #allocation3 [shape = 'u8[8192]{0}', space=vmem, size = 0x2000, scoped, tag = 'output window, operand 0']
    #allocation4 [shape = 's32[2]{0}', space=sflag, size = 0x8, scoped, tag = 'scoped memory for tpu_custom_call.1']
    %14 = vsyncpa [#allocation4], 0
    %s15 = scalar_lea.sflag [#allocation4], 1
    %16 = vsyncpa %s15, 0
    loop: start=0, step=1, limit=4
    $region2: #{tpu_custom_call.1} parent=1 // loop_pre_header
      _
    $region3: #{tpu_custom_call.1} parent=1 // loop_header
      %s18 = sphi 0, %s22
      %p19 = scmp.ge.s32.totalorder %s18, 4
      %s28 = sphi 0, %s30
      %s31 = sphi 0, %s28
      %s32 = sphi 0, %s31
      %s48 = sphi 0, %s32
      %s52 = sphi 0, %s52
      %s54 = sphi 0, %s52
      %s55 = sphi 0, %s54
      %s69 = sphi 0, %s55
      %s73 = sphi 0, %s73
      %s75 = sphi 0, %s73
      %s76 = sphi 0, %s75
      %s90 = sphi 0, %s76
      %s94 = sphi 0, %s94
      %s96 = sphi 0, %s94
      %s97 = sphi 0, %s96
      %s111 = sphi 0, %s97
      %s115 = sphi 0, %s115
      %s117 = sphi 0, %s115
      %s118 = sphi 0, %s117
      %s132 = sphi 0, %s118
      %s136 = sphi 0, %s136
      %s138 = sphi 0, %s136
      %s139 = sphi 0, %s138
      %s153 = sphi 0, %s139
      %s157 = sphi 0, %s157
      %s159 = sphi 0, %s157
      %s160 = sphi 0, %s159
      %s174 = sphi 0, %s160
      %s178 = sphi 0, %s178
      %s180 = sphi 0, %s178
      %s181 = sphi 0, %s180
      %s195 = sphi 0, %s181
      %s201 = sphi 0, %s203
      %s204 = sphi 0, %s201
      %s205 = sphi 0, %s204
      %s221 = sphi 0, %s205
    $region4: #{tpu_custom_call.1} parent=1 // loop_header_branch
      %21 = sbr.rel (%p19) target = $region8
    $region5: #{tpu_custom_call.1} parent=1 // loop_body
      %s23 = ssub.s32 %s18, 1
      %s24 = ssub.s32 %s18, 2
      %s25 = sadd.s32 %s18, 1
      %s26 = ssub.s32 %s18, %s25
      %p27 = scmp.eq.s32.totalorder %s26, 0
      %s29 = sadd.s32 %s28, 1
      %s30 = scalar_select %p27, %s28, %s29
      %p33 = pneg %p27
      %p34 = scmp.eq.s32.totalorder %s18, 1
      %p35 = por %p33, %p34
      %p36 = scmp.ne.s32.totalorder %s28, %s31
      %p37 = scmp.eq.s32.totalorder %s18, 0
      %p38 = por %p36, %p37
      %p39 = scmp.ne.s32.totalorder %s28, %s31
      %p40 = scmp.eq.s32.totalorder %s23, 1
      %p41 = por %p39, %p40
      %p42 = scmp.ne.s32.totalorder %s31, %s32
      %p43 = scmp.eq.s32.totalorder %s23, 0
      %p44 = por %p42, %p43
      %p45 = scmp.ne.s32.totalorder %s31, %s32
      %p46 = scmp.eq.s32.totalorder %s24, 1
      %p47 = por %p45, %p46
      %p49 = scmp.ne.s32.totalorder %s32, %s48
      %p50 = scmp.eq.s32.totalorder %s24, 0
      %p51 = por %p49, %p50
      %s53 = sadd.s32 %s52, 1
      %p56 = scmp.eq.s32.totalorder %s18, 1
      %p57 = scmp.ne.s32.totalorder %s52, %s54
      %p58 = scmp.eq.s32.totalorder %s18, 0
      %p59 = por %p57, %p58
      %p60 = scmp.ne.s32.totalorder %s52, %s54
      %p61 = scmp.eq.s32.totalorder %s23, 1
      %p62 = por %p60, %p61
      %p63 = scmp.ne.s32.totalorder %s54, %s55
      %p64 = scmp.eq.s32.totalorder %s23, 0
      %p65 = por %p63, %p64
      %p66 = scmp.ne.s32.totalorder %s54, %s55
      %p67 = scmp.eq.s32.totalorder %s24, 1
      %p68 = por %p66, %p67
      %p70 = scmp.ne.s32.totalorder %s55, %s69
      %p71 = scmp.eq.s32.totalorder %s24, 0
      %p72 = por %p70, %p71
      %s74 = sadd.s32 %s73, 1
      %p77 = scmp.eq.s32.totalorder %s18, 1
      %p78 = scmp.ne.s32.totalorder %s73, %s75
      %p79 = scmp.eq.s32.totalorder %s18, 0
      %p80 = por %p78, %p79
      %p81 = scmp.ne.s32.totalorder %s73, %s75
      %p82 = scmp.eq.s32.totalorder %s23, 1
      %p83 = por %p81, %p82
      %p84 = scmp.ne.s32.totalorder %s75, %s76
      %p85 = scmp.eq.s32.totalorder %s23, 0
      %p86 = por %p84, %p85
      %p87 = scmp.ne.s32.totalorder %s75, %s76
      %p88 = scmp.eq.s32.totalorder %s24, 1
      %p89 = por %p87, %p88
      %p91 = scmp.ne.s32.totalorder %s76, %s90
      %p92 = scmp.eq.s32.totalorder %s24, 0
      %p93 = por %p91, %p92
      %s95 = sadd.s32 %s94, 1
      %p98 = scmp.eq.s32.totalorder %s18, 1
      %p99 = scmp.ne.s32.totalorder %s94, %s96
      %p100 = scmp.eq.s32.totalorder %s18, 0
      %p101 = por %p99, %p100
      %p102 = scmp.ne.s32.totalorder %s94, %s96
      %p103 = scmp.eq.s32.totalorder %s23, 1
      %p104 = por %p102, %p103
      %p105 = scmp.ne.s32.totalorder %s96, %s97
      %p106 = scmp.eq.s32.totalorder %s23, 0
      %p107 = por %p105, %p106
      %p108 = scmp.ne.s32.totalorder %s96, %s97
      %p109 = scmp.eq.s32.totalorder %s24, 1
      %p110 = por %p108, %p109
      %p112 = scmp.ne.s32.totalorder %s97, %s111
      %p113 = scmp.eq.s32.totalorder %s24, 0
      %p114 = por %p112, %p113
      %s116 = sadd.s32 %s115, 1
      %p119 = scmp.eq.s32.totalorder %s18, 1
      %p120 = scmp.ne.s32.totalorder %s115, %s117
      %p121 = scmp.eq.s32.totalorder %s18, 0
      %p122 = por %p120, %p121
      %p123 = scmp.ne.s32.totalorder %s115, %s117
      %p124 = scmp.eq.s32.totalorder %s23, 1
      %p125 = por %p123, %p124
      %p126 = scmp.ne.s32.totalorder %s117, %s118
      %p127 = scmp.eq.s32.totalorder %s23, 0
      %p128 = por %p126, %p127
      %p129 = scmp.ne.s32.totalorder %s117, %s118
      %p130 = scmp.eq.s32.totalorder %s24, 1
      %p131 = por %p129, %p130
      %p133 = scmp.ne.s32.totalorder %s118, %s132
      %p134 = scmp.eq.s32.totalorder %s24, 0
      %p135 = por %p133, %p134
      %s137 = sadd.s32 %s136, 1
      %p140 = scmp.eq.s32.totalorder %s18, 1
      %p141 = scmp.ne.s32.totalorder %s136, %s138
      %p142 = scmp.eq.s32.totalorder %s18, 0
      %p143 = por %p141, %p142
      %p144 = scmp.ne.s32.totalorder %s136, %s138
      %p145 = scmp.eq.s32.totalorder %s23, 1
      %p146 = por %p144, %p145
      %p147 = scmp.ne.s32.totalorder %s138, %s139
      %p148 = scmp.eq.s32.totalorder %s23, 0
      %p149 = por %p147, %p148
      %p150 = scmp.ne.s32.totalorder %s138, %s139
      %p151 = scmp.eq.s32.totalorder %s24, 1
      %p152 = por %p150, %p151
      %p154 = scmp.ne.s32.totalorder %s139, %s153
      %p155 = scmp.eq.s32.totalorder %s24, 0
      %p156 = por %p154, %p155
      %s158 = sadd.s32 %s157, 1
      %p161 = scmp.eq.s32.totalorder %s18, 1
      %p162 = scmp.ne.s32.totalorder %s157, %s159
      %p163 = scmp.eq.s32.totalorder %s18, 0
      %p164 = por %p162, %p163
      %p165 = scmp.ne.s32.totalorder %s157, %s159
      %p166 = scmp.eq.s32.totalorder %s23, 1
      %p167 = por %p165, %p166
      %p168 = scmp.ne.s32.totalorder %s159, %s160
      %p169 = scmp.eq.s32.totalorder %s23, 0
      %p170 = por %p168, %p169
      %p171 = scmp.ne.s32.totalorder %s159, %s160
      %p172 = scmp.eq.s32.totalorder %s24, 1
      %p173 = por %p171, %p172
      %p175 = scmp.ne.s32.totalorder %s160, %s174
      %p176 = scmp.eq.s32.totalorder %s24, 0
      %p177 = por %p175, %p176
      %s179 = sadd.s32 %s178, 1
      %p182 = scmp.eq.s32.totalorder %s18, 1
      %p183 = scmp.ne.s32.totalorder %s178, %s180
      %p184 = scmp.eq.s32.totalorder %s18, 0
      %p185 = por %p183, %p184
      %p186 = scmp.ne.s32.totalorder %s178, %s180
      %p187 = scmp.eq.s32.totalorder %s23, 1
      %p188 = por %p186, %p187
      %p189 = scmp.ne.s32.totalorder %s180, %s181
      %p190 = scmp.eq.s32.totalorder %s23, 0
      %p191 = por %p189, %p190
      %p192 = scmp.ne.s32.totalorder %s180, %s181
      %p193 = scmp.eq.s32.totalorder %s24, 1
      %p194 = por %p192, %p193
      %p196 = scmp.ne.s32.totalorder %s181, %s195
      %p197 = scmp.eq.s32.totalorder %s24, 0
      %p198 = por %p196, %p197
      %s199 = ssub.s32 %s18, %s25
      %p200 = scmp.eq.s32.totalorder %s199, 0
      %s202 = sadd.s32 %s201, 1
      %s203 = scalar_select %p200, %s201, %s202
      %p206 = pneg %p200
      %p207 = scmp.eq.s32.totalorder %s18, 1
      %p208 = por %p206, %p207
      %p209 = scmp.ne.s32.totalorder %s201, %s204
      %p210 = scmp.eq.s32.totalorder %s18, 0
      %p211 = por %p209, %p210
      %p212 = scmp.ne.s32.totalorder %s201, %s204
      %p213 = scmp.eq.s32.totalorder %s23, 1
      %p214 = por %p212, %p213
      %p215 = scmp.ne.s32.totalorder %s204, %s205
      %p216 = scmp.eq.s32.totalorder %s23, 0
      %p217 = por %p215, %p216
      %p218 = scmp.ne.s32.totalorder %s204, %s205
      %p219 = scmp.eq.s32.totalorder %s24, 1
      %p220 = por %p218, %p219
      %p222 = scmp.ne.s32.totalorder %s205, %s221
      %p223 = scmp.eq.s32.totalorder %s24, 0
      %p224 = por %p222, %p223
      %p225 = scmp.le.s32.totalorder 1, %s18
      %p226 = scmp.lt.s32.totalorder %s18, 3
      %p227 = pnand %p225, %p226
      %p228 = pneg %p227
      // Predicated region
      $region9: #{tpu_custom_call.1} parent=5 // pred_check
        _
      $region10: #{tpu_custom_call.1} parent=5 // pred_check_branch
        %230 = sbr.rel (%p227) target = $region12
      $region11: #{tpu_custom_call.1} parent=5 // pred_region
        %s231 = ssub.s32 %s18, 1
        // Predicated region
        $region13: #{tpu_custom_call.1} parent=11 // pred_check
          %p232 = pneg %p65
        $region14: #{tpu_custom_call.1} parent=11 // pred_check_branch
          %234 = sbr.rel (%p232) target = $region16
        $region15: #{tpu_custom_call.1} parent=11 // pred_region
          _
        $region16: #{tpu_custom_call.1} parent=11 // pred_fallthru
          _
        // Predicated region
        $region17: #{tpu_custom_call.1} parent=11 // pred_check
          %p235 = pneg %p86
        $region18: #{tpu_custom_call.1} parent=11 // pred_check_branch
          %237 = sbr.rel (%p235) target = $region20
        $region19: #{tpu_custom_call.1} parent=11 // pred_region
          _
        $region20: #{tpu_custom_call.1} parent=11 // pred_fallthru
          _
        // Predicated region
        $region21: #{tpu_custom_call.1} parent=11 // pred_check
          %p238 = pneg %p107
        $region22: #{tpu_custom_call.1} parent=11 // pred_check_branch
          %240 = sbr.rel (%p238) target = $region24
        $region23: #{tpu_custom_call.1} parent=11 // pred_region
          _
        $region24: #{tpu_custom_call.1} parent=11 // pred_fallthru
          _
        // Predicated region
        $region25: #{tpu_custom_call.1} parent=11 // pred_check
          %p241 = pneg %p128
        $region26: #{tpu_custom_call.1} parent=11 // pred_check_branch
          %243 = sbr.rel (%p241) target = $region28
        $region27: #{tpu_custom_call.1} parent=11 // pred_region
          _
        $region28: #{tpu_custom_call.1} parent=11 // pred_fallthru
          _
        // Predicated region
        $region29: #{tpu_custom_call.1} parent=11 // pred_check
          %p244 = pneg %p149
        $region30: #{tpu_custom_call.1} parent=11 // pred_check_branch
          %246 = sbr.rel (%p244) target = $region32
        $region31: #{tpu_custom_call.1} parent=11 // pred_region
          _
        $region32: #{tpu_custom_call.1} parent=11 // pred_fallthru
          _
        // Predicated region
        $region33: #{tpu_custom_call.1} parent=11 // pred_check
          %p247 = pneg %p170
        $region34: #{tpu_custom_call.1} parent=11 // pred_check_branch
          %249 = sbr.rel (%p247) target = $region36
        $region35: #{tpu_custom_call.1} parent=11 // pred_region
          _
        $region36: #{tpu_custom_call.1} parent=11 // pred_fallthru
          _
        // Predicated region
        $region37: #{tpu_custom_call.1} parent=11 // pred_check
          %p250 = pneg %p191
        $region38: #{tpu_custom_call.1} parent=11 // pred_check_branch
          %252 = sbr.rel (%p250) target = $region40
        $region39: #{tpu_custom_call.1} parent=11 // pred_region
          _
        $region40: #{tpu_custom_call.1} parent=11 // pred_fallthru
          _
      $region12: #{tpu_custom_call.1} parent=5 // pred_fallthru
        _
      %p253 = scmp.lt.s32.totalorder %s18, 2
      // Predicated region
      $region41: #{tpu_custom_call.1} parent=5 // pred_check
        %p254 = pneg %p253
      $region42: #{tpu_custom_call.1} parent=5 // pred_check_branch
        %256 = sbr.rel (%p254) target = $region44
      $region43: #{tpu_custom_call.1} parent=5 // pred_region
        // Predicated region
        $region45: #{tpu_custom_call.1} parent=43 // pred_check
          %p257 = pneg %p38
        $region46: #{tpu_custom_call.1} parent=43 // pred_check_branch
          %259 = sbr.rel (%p257) target = $region48
        $region47: #{tpu_custom_call.1} parent=43 // pred_region
          %p260 = scmp.lt.s32.totalorder %s18, 1
          %s261 = scalar_select %p260, %s18, 1
          %s262 = smul.addr %s261, 8
          %s263 = scalar_lea.vmem %s0, %s262
        $region48: #{tpu_custom_call.1} parent=43 // pred_fallthru
          _
      $region44: #{tpu_custom_call.1} parent=5 // pred_fallthru
        _
      %p264 = scmp.le.s32.totalorder 1, %s18
      %p265 = scmp.lt.s32.totalorder %s18, 3
      %p266 = pnand %p264, %p265
      %p267 = pneg %p266
      // Predicated region
      $region49: #{tpu_custom_call.1} parent=5 // pred_check
        _
      $region50: #{tpu_custom_call.1} parent=5 // pred_check_branch
        %269 = sbr.rel (%p266) target = $region52
      $region51: #{tpu_custom_call.1} parent=5 // pred_region
        %s270 = ssub.s32 %s18, 1
        %p271 = scmp.lt.s32.totalorder %s23, 1
        %s272 = scalar_select %p271, %s23, 1
        %s273 = smul.addr %s272, 8
        %s274 = scalar_lea.vmem %s0, %s273
        %p275 = pneg %p44
        %p276 = pneg %p41
        %p277 = pneg %p65
        %p278 = pneg %p62
        %p279 = pneg %p86
        %p280 = pneg %p83
        %p281 = pneg %p107
        %p282 = pneg %p104
        %p283 = pneg %p128
        %p284 = pneg %p125
        %p285 = pneg %p149
        %p286 = pneg %p146
        %p287 = pneg %p170
        %p288 = pneg %p167
        %p289 = pneg %p191
        %p290 = pneg %p188
        %p291 = pneg %p217
        %p292 = pneg %p214
        %s293 = sand.u32 %s204, 1
        %s294 = scalar_lea.sflag [#allocation4], %s293
        %s295 = sand.u32 %s204, 1
        %s296 = smul.addr %s295, 8
        %s297 = scalar_lea.vmem [#allocation3], %s296
        %p298 = scmp.lt.s32.totalorder %s23, 1
        %s299 = scalar_select %p298, %s23, 1
        %s300 = smul.addr %s299, 8
        %s301 = scalar_lea.vmem %s0, %s300
        %v302 = vld [vmem:[%s301] sm:$0xff]
        %vm303 = vcmask 261120
        %v304 = vsel %vm303, %v302, 0.0
        %305 = vadd.xlane.f32.xlu0 %v304
        %v306 = vpop.xlane.xlu0 %305
        %v307 = vmul.f32 %v302, %v302
        %v308 = vsel %vm303, %v307, 0.0
        %309 = vadd.xlane.f32.xlu0 %v308
        %v310 = vpop.xlane.xlu0 %309
        %v311 = vmul.f32 %v306, 0.03125
        %v312 = vmul.f32 %v310, 0.03125
        %v313 = vmul.f32 %v311, %v311
        %v314 = vsub.f32 %v312, %v313
        %v315 = vmax.f32 %v314, 0.0
        %v316 = vadd.f32 %v315, 1e-05
        %v317 = vrsqrt.pop %v316
        %v318 = vsub.f32 %v302, %v311
        %v319 = vmul.f32 %v318, %v317
        %v320 = vld [vmem:[%s1] sm:$0x1]
        %v322 = vlaneseq
        %v323 = vshrl.u32 %v322, 7
        %v324 = vsub.s32 0, %v323
        %v325 = vrot.slane %v320, %v324
        %v327 = vmul.f32 %v319, %v325
        %v328 = vld [vmem:[%s2] sm:$0x1]
        %v330 = vlaneseq
        %v331 = vshrl.u32 %v330, 7
        %v332 = vsub.s32 0, %v331
        %v333 = vrot.slane %v328, %v332
        %v335 = vadd.f32 %v327, %v333
        %v336 = vld [vmem:[%s3] sm:$0xff]
        %v337 = vld [vmem:[%s3 + $0x8] sm:$0xff]
        %v338 = vld [vmem:[%s3 + $0x10] sm:$0xff]
        %v339 = vld [vmem:[%s3 + $0x18] sm:$0xff]
        %v340 = vld [vmem:[%s4] sm:$0x1]
        %v342 = vlaneseq
        %v343 = vshrl.u32 %v342, 7
        %v344 = vsub.s32 0, %v343
        %v345 = vrot.slane %v340, %v344
        %v348 = vsel %vm303, %v335, 0
        %350 = vmatprep.subr.mxu0 0.0
        %351 = vmatpush1.msra.mxu0 %v336
        %352 = vmatprep.subr.mxu0 0.0
        %353 = vmatpush1.msra.mxu0 %v337
        %354 = vmatprep.subr.mxu0 0.0
        %355 = vmatpush1.msra.mxu0 %v338
        %356 = vmatprep.subr.mxu0 0.0
        %357 = vmatpush1.msra.mxu0 %v339
        %358 = vmatprep.subr.mxu0 0.0
        %359 = vmatpush1.msra.mxu0 0.0
        %360 = vmatprep.subr.mxu0 0.0
        %361 = vmatpush1.msra.mxu0 0.0
        %362 = vmatprep.subr.mxu0 0.0
        %363 = vmatpush1.msra.mxu0 0.0
        %364 = vmatprep.subr.mxu0 0.0
        %365 = vmatpush1.msra.mxu0 0.0
        %366 = vmatprep.subr.mxu0 0.0
        %367 = vmatpush1.msra.mxu0 0.0
        %368 = vmatprep.subr.mxu0 0.0
        %369 = vmatpush1.msra.mxu0 0.0
        %370 = vmatprep.subr.mxu0 0.0
        %371 = vmatpush1.msra.mxu0 0.0
        %372 = vmatprep.subr.mxu0 0.0
        %373 = vmatpush1.msra.mxu0 0.0
        %374 = vmatprep.subr.mxu0 0.0
        %375 = vmatpush1.msra.mxu0 0.0
        %376 = vmatprep.subr.mxu0 0.0
        %377 = vmatpush1.msra.mxu0 0.0
        %378 = vmatprep.subr.mxu0 0.0
        %379 = vmatpush1.msra.mxu0 0.0
        %380 = vmatprep.subr.mxu0 0.0
        %381 = vmatpush1.msra.mxu0 0.0
        %382 = vmatprep.subr.mxu0 0.0
        %383 = vmatpush1.msra.mxu0 0.0
        %384 = vmatprep.subr.mxu0 0.0
        %385 = vmatpush1.msra.mxu0 0.0
        %386 = vmatprep.subr.mxu0 0.0
        %387 = vmatpush1.msra.mxu0 0.0
        %388 = vmatprep.subr.mxu0 0.0
        %389 = vmatpush1.msra.mxu0 0.0
        %390 = vmatprep.subr.mxu0 0.0
        %391 = vmatpush1.msra.mxu0 0.0
        %392 = vmatprep.subr.mxu0 0.0
        %393 = vmatpush1.msra.mxu0 0.0
        %394 = vmatprep.subr.mxu0 0.0
        %395 = vmatpush1.msra.mxu0 0.0
        %396 = vmatprep.subr.mxu0 0.0
        %397 = vmatpush1.msra.mxu0 0.0
        %398 = vmatprep.subr.mxu0 0.0
        %399 = vmatpush1.msra.mxu0 0.0
        %400 = vmatprep.subr.mxu0 0.0
        %401 = vmatpush1.msra.mxu0 0.0
        %402 = vmatprep.subr.mxu0 0.0
        %403 = vmatpush1.msra.mxu0 0.0
        %404 = vmatprep.subr.mxu0 0.0
        %405 = vmatpush1.msra.mxu0 0.0
        %406 = vmatprep.subr.mxu0 0.0
        %407 = vmatpush1.msra.mxu0 0.0
        %408 = vmatprep.subr.mxu0 0.0
        %409 = vmatpush1.msra.mxu0 0.0
        %410 = vmatprep.subr.mxu0 0.0
        %411 = vmatpush1.msra.mxu0 0.0
        %412 = vmatprep.subr.mxu0 0.0
        %413 = vmatpush1.msra.mxu0 0.0
        %414 = vmatprep.mubr.f32.mxu0 0.0
        %415 = vmatmul.mubr.f32.gmra.mrb[0].mxu0 %v348
        %v416 = vpop.f32.mrb[0].mxu0
        %v417 = vadd.f32 %v345, %v416
        %v418 = vpop.f32.mrb[0].mxu0
        %419 = vdwg.mxu0
        %v420 = vmax.f32 %v417, 0.0
        %s421 = sld [smem:[#allocation2]]
        %v422 = vstv %s421
        %v423 = vmul.f32 %v420, %v422
        %v424 = vld [vmem:[%s5] sm:$0xff]
        %v425 = vld [vmem:[%s5 + $0x8] sm:$0xff]
        %v426 = vld [vmem:[%s5 + $0x10] sm:$0xff]
        %v427 = vld [vmem:[%s5 + $0x18] sm:$0xff]
        %v428 = vld [vmem:[%s5 + $0x20] sm:$0xff]
        %v429 = vld [vmem:[%s5 + $0x28] sm:$0xff]
        %v430 = vld [vmem:[%s5 + $0x30] sm:$0xff]
        %v431 = vld [vmem:[%s5 + $0x38] sm:$0xff]
        %v432 = vld [vmem:[%s5 + $0x40] sm:$0xff]
        %v433 = vld [vmem:[%s5 + $0x48] sm:$0xff]
        %v434 = vld [vmem:[%s5 + $0x50] sm:$0xff]
        %v435 = vld [vmem:[%s5 + $0x58] sm:$0xff]
        %v436 = vld [vmem:[%s5 + $0x60] sm:$0xff]
        %v437 = vld [vmem:[%s5 + $0x68] sm:$0xff]
        %v438 = vld [vmem:[%s5 + $0x70] sm:$0xff]
        %v439 = vld [vmem:[%s5 + $0x78] sm:$0xff]
        %v440 = vld [vmem:[%s6] sm:$0x1]
        %v442 = vlaneseq
        %v443 = vshrl.u32 %v442, 7
        %v444 = vsub.s32 0, %v443
        %v445 = vrot.slane %v440, %v444
        %447 = vmatprep.subr.mxu0 0.0
        %448 = vmatpush1.msra.mxu0 %v424
        %449 = vmatprep.subr.mxu0 0.0
        %450 = vmatpush1.msra.mxu0 %v425
        %451 = vmatprep.subr.mxu0 0.0
        %452 = vmatpush1.msra.mxu0 %v426
        %453 = vmatprep.subr.mxu0 0.0
        %454 = vmatpush1.msra.mxu0 %v427
        %455 = vmatprep.subr.mxu0 0.0
        %456 = vmatpush1.msra.mxu0 %v428
        %457 = vmatprep.subr.mxu0 0.0
        %458 = vmatpush1.msra.mxu0 %v429
        %459 = vmatprep.subr.mxu0 0.0
        %460 = vmatpush1.msra.mxu0 %v430
        %461 = vmatprep.subr.mxu0 0.0
        %462 = vmatpush1.msra.mxu0 %v431
        %463 = vmatprep.subr.mxu0 0.0
        %464 = vmatpush1.msra.mxu0 %v432
        %465 = vmatprep.subr.mxu0 0.0
        %466 = vmatpush1.msra.mxu0 %v433
        %467 = vmatprep.subr.mxu0 0.0
        %468 = vmatpush1.msra.mxu0 %v434
        %469 = vmatprep.subr.mxu0 0.0
        %470 = vmatpush1.msra.mxu0 %v435
        %471 = vmatprep.subr.mxu0 0.0
        %472 = vmatpush1.msra.mxu0 %v436
        %473 = vmatprep.subr.mxu0 0.0
        %474 = vmatpush1.msra.mxu0 %v437
        %475 = vmatprep.subr.mxu0 0.0
        %476 = vmatpush1.msra.mxu0 %v438
        %477 = vmatprep.subr.mxu0 0.0
        %478 = vmatpush1.msra.mxu0 %v439
        %479 = vmatprep.subr.mxu0 0.0
        %480 = vmatpush1.msra.mxu0 0.0
        %481 = vmatprep.subr.mxu0 0.0
        %482 = vmatpush1.msra.mxu0 0.0
        %483 = vmatprep.subr.mxu0 0.0
        %484 = vmatpush1.msra.mxu0 0.0
        %485 = vmatprep.subr.mxu0 0.0
        %486 = vmatpush1.msra.mxu0 0.0
        %487 = vmatprep.subr.mxu0 0.0
        %488 = vmatpush1.msra.mxu0 0.0
        %489 = vmatprep.subr.mxu0 0.0
        %490 = vmatpush1.msra.mxu0 0.0
        %491 = vmatprep.subr.mxu0 0.0
        %492 = vmatpush1.msra.mxu0 0.0
        %493 = vmatprep.subr.mxu0 0.0
        %494 = vmatpush1.msra.mxu0 0.0
        %495 = vmatprep.subr.mxu0 0.0
        %496 = vmatpush1.msra.mxu0 0.0
        %497 = vmatprep.subr.mxu0 0.0
        %498 = vmatpush1.msra.mxu0 0.0
        %499 = vmatprep.subr.mxu0 0.0
        %500 = vmatpush1.msra.mxu0 0.0
        %501 = vmatprep.subr.mxu0 0.0
        %502 = vmatpush1.msra.mxu0 0.0
        %503 = vmatprep.subr.mxu0 0.0
        %504 = vmatpush1.msra.mxu0 0.0
        %505 = vmatprep.subr.mxu0 0.0
        %506 = vmatpush1.msra.mxu0 0.0
        %507 = vmatprep.subr.mxu0 0.0
        %508 = vmatpush1.msra.mxu0 0.0
        %509 = vmatprep.subr.mxu0 0.0
        %510 = vmatpush1.msra.mxu0 0.0
        %511 = vmatprep.mubr.f32.mxu0 0.0
        %512 = vmatmul.mubr.f32.gmra.mrb[0].mxu0 %v423
        %v513 = vpop.f32.mrb[0].mxu0
        %v514 = vadd.f32 %v445, %v513
        %v515 = vpop.f32.mrb[0].mxu0
        %516 = vdwg.mxu0
        %517 = vst.msk [vmem:[%s297] sm:$0xff] %vm303, %v514
        %s518 = sand.u32 %s204, 1
        %s519 = scalar_lea.sflag [#allocation4], %s518
        %s520 = sand.u32 %s204, 1
        %s521 = smul.addr %s520, 8
        %s522 = scalar_lea.vmem [#allocation3], %s521
        // Predicated region
        $region53: #{tpu_custom_call.1} parent=51 // pred_check
          %p523 = pneg %p214
        $region54: #{tpu_custom_call.1} parent=51 // pred_check_branch
          %525 = sbr.rel (%p523) target = $region56
        $region55: #{tpu_custom_call.1} parent=51 // pred_region
          %s527 = ssub.s32 128, 128
          %528 = vsyncadd %s519, %s527
          %s529 = smul.addr %s23, 128
          %s530 = scalar_lea.hbm %s8, %s529
          %s532 = sshll.u32 %s522, 4
          %s533 = int_to_ptr.vmem [resolvable:$true] %s532
          %535 = dma.vmem_to_hbm [thread:$0]  %s533, 128, %s530, %s519
        $region56: #{tpu_custom_call.1} parent=51 // pred_fallthru
          _
      $region52: #{tpu_custom_call.1} parent=5 // pred_fallthru
        _
      %p536 = scmp.le.s32.totalorder 2, %s18
      // Predicated region
      $region57: #{tpu_custom_call.1} parent=5 // pred_check
        %p537 = pneg %p536
      $region58: #{tpu_custom_call.1} parent=5 // pred_check_branch
        %539 = sbr.rel (%p537) target = $region60
      $region59: #{tpu_custom_call.1} parent=5 // pred_region
        %s540 = ssub.s32 %s18, 2
        // Predicated region
        $region61: #{tpu_custom_call.1} parent=59 // pred_check
          %p541 = pneg %p220
        $region62: #{tpu_custom_call.1} parent=59 // pred_check_branch
          %543 = sbr.rel (%p541) target = $region64
        $region63: #{tpu_custom_call.1} parent=59 // pred_region
          %s544 = sand.u32 %s205, 1
          %s545 = scalar_lea.sflag [#allocation4], %s544
          %s546 = sand.u32 %s205, 1
          %s547 = smul.addr %s546, 8
          %s548 = scalar_lea.vmem [#allocation3], %s547
          %549 = dma.done %s545, 128
        $region64: #{tpu_custom_call.1} parent=59 // pred_fallthru
          _
      $region60: #{tpu_custom_call.1} parent=5 // pred_fallthru
        _
    $region6: #{tpu_custom_call.1} parent=1 // loop_footer
      %s22 = sadd.s32 1, %s18
    $region7: #{tpu_custom_call.1} parent=1 // loop_footer_branch
      %17 = sbr.rel target = $region3
    $region8: #{tpu_custom_call.1} parent=1 // loop_exit
      _
    %550 = vsyncpa [#allocation4], 1
    %s551 = scalar_lea.sflag [#allocation4], 1
    %552 = vsyncpa %s551, 1

// kernel: tpu_custom_call.1
$region0: #{tpu_custom_call.1}
  #allocation0 [shape = 'u32[]', space=smem, size = 0x4, offset = 0x4, fixed_abs, tag = 'smem constant byte address 0x4 - core index']
  #allocation1 [shape = 'u32[144,128]{1,0:T(1,128)}', space=vmem, size = 0x12000, scoped, tag = 'internal scratch']
  #allocation2 [shape = 'f32[1]{0:T(128)S(6)}', space=smem, size = 0x200, scoped, tag = 'scoped memory for tpu_custom_call.1']
  %s0 = inlined_call_operand.vmem [shape: f32[16,32], index: 0, kind: input, shape index: {}]
  %s1 = inlined_call_operand.vmem [shape: f32[1,32], index: 1, kind: input, shape index: {}]
  %s2 = inlined_call_operand.vmem [shape: f32[1,32], index: 2, kind: input, shape index: {}]
  %s3 = inlined_call_operand.vmem [shape: f32[32,128], index: 3, kind: input, shape index: {}]
  %s4 = inlined_call_operand.vmem [shape: f32[1,128], index: 4, kind: input, shape index: {}]
  %s5 = inlined_call_operand.vmem [shape: f32[128,32], index: 5, kind: input, shape index: {}]
  %s6 = inlined_call_operand.vmem [shape: f32[1,32], index: 6, kind: input, shape index: {}]
  %s7 = inlined_call_operand.<no memory space> [shape: f32[1], index: 7, kind: input, shape index: {}]
  %s8 = inlined_call_operand.hbm [shape: f32[16,32], index: 8, kind: output, shape index: {}]
  %s9 = sld [smem:[#allocation0]]
  $region65: #{tpu_custom_call.1} parent=0
    _
  %s11 = ssub.s32 1, %s9
  %s12 = scalar_select 0, %s11, %s9
  %13 = sst [smem:[#allocation2]] %s7
  $region1: #{tpu_custom_call.1} parent=0
    #allocation3 [shape = 'u8[8192]{0}', space=vmem, size = 0x2000, scoped, tag = 'output window, operand 0']
    #allocation4 [shape = 's32[2]{0}', space=sflag, size = 0x8, scoped, tag = 'scoped memory for tpu_custom_call.1']
    %14 = vsyncpa [#allocation4], 0
    %s15 = scalar_lea.sflag [#allocation4], 1
    %16 = vsyncpa %s15, 0
    loop: start=0, step=1, limit=4
    $region2: #{tpu_custom_call.1} parent=1 // loop_pre_header
      _
    $region3: #{tpu_custom_call.1} parent=1 // loop_header
      %s18 = sphi 0, %s22
      %p19 = scmp.ge.s32.totalorder %s18, 4
      %s28 = sphi 0, %s30
      %s31 = sphi 0, %s28
      %s32 = sphi 0, %s31
      %s48 = sphi 0, %s32
      %s52 = sphi 0, %s52
      %s54 = sphi 0, %s52
      %s55 = sphi 0, %s54
      %s69 = sphi 0, %s55
      %s73 = sphi 0, %s73
      %s75 = sphi 0, %s73
      %s76 = sphi 0, %s75
      %s90 = sphi 0, %s76
      %s94 = sphi 0, %s94
      %s96 = sphi 0, %s94
      %s97 = sphi 0, %s96
      %s111 = sphi 0, %s97
      %s115 = sphi 0, %s115
      %s117 = sphi 0, %s115
      %s118 = sphi 0, %s117
      %s132 = sphi 0, %s118
      %s136 = sphi 0, %s136
      %s138 = sphi 0, %s136
      %s139 = sphi 0, %s138
      %s153 = sphi 0, %s139
      %s157 = sphi 0, %s157
      %s159 = sphi 0, %s157
      %s160 = sphi 0, %s159
      %s174 = sphi 0, %s160
      %s178 = sphi 0, %s178
      %s180 = sphi 0, %s178
      %s181 = sphi 0, %s180
      %s195 = sphi 0, %s181
      %s201 = sphi 0, %s203
      %s204 = sphi 0, %s201
      %s205 = sphi 0, %s204
      %s221 = sphi 0, %s205
    $region4: #{tpu_custom_call.1} parent=1 // loop_header_branch
      %21 = sbr.rel (%p19) target = $region8
    $region5: #{tpu_custom_call.1} parent=1 // loop_body
      %s23 = ssub.s32 %s18, 1
      %s24 = ssub.s32 %s18, 2
      %s25 = sadd.s32 %s18, 1
      %s26 = ssub.s32 %s18, %s25
      %p27 = scmp.eq.s32.totalorder %s26, 0
      %s29 = sadd.s32 %s28, 1
      %s30 = scalar_select %p27, %s28, %s29
      %p33 = pneg %p27
      %p34 = scmp.eq.s32.totalorder %s18, 1
      %p35 = por %p33, %p34
      %p36 = scmp.ne.s32.totalorder %s28, %s31
      %p37 = scmp.eq.s32.totalorder %s18, 0
      %p38 = por %p36, %p37
      %p39 = scmp.ne.s32.totalorder %s28, %s31
      %p40 = scmp.eq.s32.totalorder %s23, 1
      %p41 = por %p39, %p40
      %p42 = scmp.ne.s32.totalorder %s31, %s32
      %p43 = scmp.eq.s32.totalorder %s23, 0
      %p44 = por %p42, %p43
      %p45 = scmp.ne.s32.totalorder %s31, %s32
      %p46 = scmp.eq.s32.totalorder %s24, 1
      %p47 = por %p45, %p46
      %p49 = scmp.ne.s32.totalorder %s32, %s48
      %p50 = scmp.eq.s32.totalorder %s24, 0
      %p51 = por %p49, %p50
      %s53 = sadd.s32 %s52, 1
      %p56 = scmp.eq.s32.totalorder %s18, 1
      %p57 = scmp.ne.s32.totalorder %s52, %s54
      %p58 = scmp.eq.s32.totalorder %s18, 0
      %p59 = por %p57, %p58
      %p60 = scmp.ne.s32.totalorder %s52, %s54
      %p61 = scmp.eq.s32.totalorder %s23, 1
      %p62 = por %p60, %p61
      %p63 = scmp.ne.s32.totalorder %s54, %s55
      %p64 = scmp.eq.s32.totalorder %s23, 0
      %p65 = por %p63, %p64
      %p66 = scmp.ne.s32.totalorder %s54, %s55
      %p67 = scmp.eq.s32.totalorder %s24, 1
      %p68 = por %p66, %p67
      %p70 = scmp.ne.s32.totalorder %s55, %s69
      %p71 = scmp.eq.s32.totalorder %s24, 0
      %p72 = por %p70, %p71
      %s74 = sadd.s32 %s73, 1
      %p77 = scmp.eq.s32.totalorder %s18, 1
      %p78 = scmp.ne.s32.totalorder %s73, %s75
      %p79 = scmp.eq.s32.totalorder %s18, 0
      %p80 = por %p78, %p79
      %p81 = scmp.ne.s32.totalorder %s73, %s75
      %p82 = scmp.eq.s32.totalorder %s23, 1
      %p83 = por %p81, %p82
      %p84 = scmp.ne.s32.totalorder %s75, %s76
      %p85 = scmp.eq.s32.totalorder %s23, 0
      %p86 = por %p84, %p85
      %p87 = scmp.ne.s32.totalorder %s75, %s76
      %p88 = scmp.eq.s32.totalorder %s24, 1
      %p89 = por %p87, %p88
      %p91 = scmp.ne.s32.totalorder %s76, %s90
      %p92 = scmp.eq.s32.totalorder %s24, 0
      %p93 = por %p91, %p92
      %s95 = sadd.s32 %s94, 1
      %p98 = scmp.eq.s32.totalorder %s18, 1
      %p99 = scmp.ne.s32.totalorder %s94, %s96
      %p100 = scmp.eq.s32.totalorder %s18, 0
      %p101 = por %p99, %p100
      %p102 = scmp.ne.s32.totalorder %s94, %s96
      %p103 = scmp.eq.s32.totalorder %s23, 1
      %p104 = por %p102, %p103
      %p105 = scmp.ne.s32.totalorder %s96, %s97
      %p106 = scmp.eq.s32.totalorder %s23, 0
      %p107 = por %p105, %p106
      %p108 = scmp.ne.s32.totalorder %s96, %s97
      %p109 = scmp.eq.s32.totalorder %s24, 1
      %p110 = por %p108, %p109
      %p112 = scmp.ne.s32.totalorder %s97, %s111
      %p113 = scmp.eq.s32.totalorder %s24, 0
      %p114 = por %p112, %p113
      %s116 = sadd.s32 %s115, 1
      %p119 = scmp.eq.s32.totalorder %s18, 1
      %p120 = scmp.ne.s32.totalorder %s115, %s117
      %p121 = scmp.eq.s32.totalorder %s18, 0
      %p122 = por %p120, %p121
      %p123 = scmp.ne.s32.totalorder %s115, %s117
      %p124 = scmp.eq.s32.totalorder %s23, 1
      %p125 = por %p123, %p124
      %p126 = scmp.ne.s32.totalorder %s117, %s118
      %p127 = scmp.eq.s32.totalorder %s23, 0
      %p128 = por %p126, %p127
      %p129 = scmp.ne.s32.totalorder %s117, %s118
      %p130 = scmp.eq.s32.totalorder %s24, 1
      %p131 = por %p129, %p130
      %p133 = scmp.ne.s32.totalorder %s118, %s132
      %p134 = scmp.eq.s32.totalorder %s24, 0
      %p135 = por %p133, %p134
      %s137 = sadd.s32 %s136, 1
      %p140 = scmp.eq.s32.totalorder %s18, 1
      %p141 = scmp.ne.s32.totalorder %s136, %s138
      %p142 = scmp.eq.s32.totalorder %s18, 0
      %p143 = por %p141, %p142
      %p144 = scmp.ne.s32.totalorder %s136, %s138
      %p145 = scmp.eq.s32.totalorder %s23, 1
      %p146 = por %p144, %p145
      %p147 = scmp.ne.s32.totalorder %s138, %s139
      %p148 = scmp.eq.s32.totalorder %s23, 0
      %p149 = por %p147, %p148
      %p150 = scmp.ne.s32.totalorder %s138, %s139
      %p151 = scmp.eq.s32.totalorder %s24, 1
      %p152 = por %p150, %p151
      %p154 = scmp.ne.s32.totalorder %s139, %s153
      %p155 = scmp.eq.s32.totalorder %s24, 0
      %p156 = por %p154, %p155
      %s158 = sadd.s32 %s157, 1
      %p161 = scmp.eq.s32.totalorder %s18, 1
      %p162 = scmp.ne.s32.totalorder %s157, %s159
      %p163 = scmp.eq.s32.totalorder %s18, 0
      %p164 = por %p162, %p163
      %p165 = scmp.ne.s32.totalorder %s157, %s159
      %p166 = scmp.eq.s32.totalorder %s23, 1
      %p167 = por %p165, %p166
      %p168 = scmp.ne.s32.totalorder %s159, %s160
      %p169 = scmp.eq.s32.totalorder %s23, 0
      %p170 = por %p168, %p169
      %p171 = scmp.ne.s32.totalorder %s159, %s160
      %p172 = scmp.eq.s32.totalorder %s24, 1
      %p173 = por %p171, %p172
      %p175 = scmp.ne.s32.totalorder %s160, %s174
      %p176 = scmp.eq.s32.totalorder %s24, 0
      %p177 = por %p175, %p176
      %s179 = sadd.s32 %s178, 1
      %p182 = scmp.eq.s32.totalorder %s18, 1
      %p183 = scmp.ne.s32.totalorder %s178, %s180
      %p184 = scmp.eq.s32.totalorder %s18, 0
      %p185 = por %p183, %p184
      %p186 = scmp.ne.s32.totalorder %s178, %s180
      %p187 = scmp.eq.s32.totalorder %s23, 1
      %p188 = por %p186, %p187
      %p189 = scmp.ne.s32.totalorder %s180, %s181
      %p190 = scmp.eq.s32.totalorder %s23, 0
      %p191 = por %p189, %p190
      %p192 = scmp.ne.s32.totalorder %s180, %s181
      %p193 = scmp.eq.s32.totalorder %s24, 1
      %p194 = por %p192, %p193
      %p196 = scmp.ne.s32.totalorder %s181, %s195
      %p197 = scmp.eq.s32.totalorder %s24, 0
      %p198 = por %p196, %p197
      %s199 = ssub.s32 %s18, %s25
      %p200 = scmp.eq.s32.totalorder %s199, 0
      %s202 = sadd.s32 %s201, 1
      %s203 = scalar_select %p200, %s201, %s202
      %p206 = pneg %p200
      %p207 = scmp.eq.s32.totalorder %s18, 1
      %p208 = por %p206, %p207
      %p209 = scmp.ne.s32.totalorder %s201, %s204
      %p210 = scmp.eq.s32.totalorder %s18, 0
      %p211 = por %p209, %p210
      %p212 = scmp.ne.s32.totalorder %s201, %s204
      %p213 = scmp.eq.s32.totalorder %s23, 1
      %p214 = por %p212, %p213
      %p215 = scmp.ne.s32.totalorder %s204, %s205
      %p216 = scmp.eq.s32.totalorder %s23, 0
      %p217 = por %p215, %p216
      %p218 = scmp.ne.s32.totalorder %s204, %s205
      %p219 = scmp.eq.s32.totalorder %s24, 1
      %p220 = por %p218, %p219
      %p222 = scmp.ne.s32.totalorder %s205, %s221
      %p223 = scmp.eq.s32.totalorder %s24, 0
      %p224 = por %p222, %p223
      %p225 = scmp.le.s32.totalorder 1, %s18
      %p226 = scmp.lt.s32.totalorder %s18, 3
      %p227 = pnand %p225, %p226
      %p228 = pneg %p227
      // Predicated region
      $region9: #{tpu_custom_call.1} parent=5 // pred_check
        _
      $region10: #{tpu_custom_call.1} parent=5 // pred_check_branch
        %230 = sbr.rel (%p227) target = $region12
      $region11: #{tpu_custom_call.1} parent=5 // pred_region
        %s231 = ssub.s32 %s18, 1
        // Predicated region
        $region13: #{tpu_custom_call.1} parent=11 // pred_check
          %p232 = pneg %p65
        $region14: #{tpu_custom_call.1} parent=11 // pred_check_branch
          %234 = sbr.rel (%p232) target = $region16
        $region15: #{tpu_custom_call.1} parent=11 // pred_region
          _
        $region16: #{tpu_custom_call.1} parent=11 // pred_fallthru
          _
        // Predicated region
        $region17: #{tpu_custom_call.1} parent=11 // pred_check
          %p235 = pneg %p86
        $region18: #{tpu_custom_call.1} parent=11 // pred_check_branch
          %237 = sbr.rel (%p235) target = $region20
        $region19: #{tpu_custom_call.1} parent=11 // pred_region
          _
        $region20: #{tpu_custom_call.1} parent=11 // pred_fallthru
          _
        // Predicated region
        $region21: #{tpu_custom_call.1} parent=11 // pred_check
          %p238 = pneg %p107
        $region22: #{tpu_custom_call.1} parent=11 // pred_check_branch
          %240 = sbr.rel (%p238) target = $region24
        $region23: #{tpu_custom_call.1} parent=11 // pred_region
          _
        $region24: #{tpu_custom_call.1} parent=11 // pred_fallthru
          _
        // Predicated region
        $region25: #{tpu_custom_call.1} parent=11 // pred_check
          %p241 = pneg %p128
        $region26: #{tpu_custom_call.1} parent=11 // pred_check_branch
          %243 = sbr.rel (%p241) target = $region28
        $region27: #{tpu_custom_call.1} parent=11 // pred_region
          _
        $region28: #{tpu_custom_call.1} parent=11 // pred_fallthru
          _
        // Predicated region
        $region29: #{tpu_custom_call.1} parent=11 // pred_check
          %p244 = pneg %p149
        $region30: #{tpu_custom_call.1} parent=11 // pred_check_branch
          %246 = sbr.rel (%p244) target = $region32
        $region31: #{tpu_custom_call.1} parent=11 // pred_region
          _
        $region32: #{tpu_custom_call.1} parent=11 // pred_fallthru
          _
        // Predicated region
        $region33: #{tpu_custom_call.1} parent=11 // pred_check
          %p247 = pneg %p170
        $region34: #{tpu_custom_call.1} parent=11 // pred_check_branch
          %249 = sbr.rel (%p247) target = $region36
        $region35: #{tpu_custom_call.1} parent=11 // pred_region
          _
        $region36: #{tpu_custom_call.1} parent=11 // pred_fallthru
          _
        // Predicated region
        $region37: #{tpu_custom_call.1} parent=11 // pred_check
          %p250 = pneg %p191
        $region38: #{tpu_custom_call.1} parent=11 // pred_check_branch
          %252 = sbr.rel (%p250) target = $region40
        $region39: #{tpu_custom_call.1} parent=11 // pred_region
          _
        $region40: #{tpu_custom_call.1} parent=11 // pred_fallthru
          _
      $region12: #{tpu_custom_call.1} parent=5 // pred_fallthru
        _
      %p253 = scmp.lt.s32.totalorder %s18, 2
      // Predicated region
      $region41: #{tpu_custom_call.1} parent=5 // pred_check
        %p254 = pneg %p253
      $region42: #{tpu_custom_call.1} parent=5 // pred_check_branch
        %256 = sbr.rel (%p254) target = $region44
      $region43: #{tpu_custom_call.1} parent=5 // pred_region
        // Predicated region
        $region45: #{tpu_custom_call.1} parent=43 // pred_check
          %p257 = pneg %p38
        $region46: #{tpu_custom_call.1} parent=43 // pred_check_branch
          %259 = sbr.rel (%p257) target = $region48
        $region47: #{tpu_custom_call.1} parent=43 // pred_region
          %p260 = scmp.lt.s32.totalorder %s18, 1
          %s261 = scalar_select %p260, %s18, 1
          %s262 = smul.addr %s261, 8
          %s263 = scalar_lea.vmem %s0, %s262
        $region48: #{tpu_custom_call.1} parent=43 // pred_fallthru
          _
      $region44: #{tpu_custom_call.1} parent=5 // pred_fallthru
        _
      %p264 = scmp.le.s32.totalorder 1, %s18
      %p265 = scmp.lt.s32.totalorder %s18, 3
      %p266 = pnand %p264, %p265
      %p267 = pneg %p266
      // Predicated region
      $region49: #{tpu_custom_call.1} parent=5 // pred_check
        _
      $region50: #{tpu_custom_call.1} parent=5 // pred_check_branch
        %269 = sbr.rel (%p266) target = $region52
      $region51: #{tpu_custom_call.1} parent=5 // pred_region
        %s270 = ssub.s32 %s18, 1
        %p271 = scmp.lt.s32.totalorder %s23, 1
        %s272 = scalar_select %p271, %s23, 1
        %s273 = smul.addr %s272, 8
        %s274 = scalar_lea.vmem %s0, %s273
        %p275 = pneg %p44
        %p276 = pneg %p41
        %p277 = pneg %p65
        %p278 = pneg %p62
        %p279 = pneg %p86
        %p280 = pneg %p83
        %p281 = pneg %p107
        %p282 = pneg %p104
        %p283 = pneg %p128
        %p284 = pneg %p125
        %p285 = pneg %p149
        %p286 = pneg %p146
        %p287 = pneg %p170
        %p288 = pneg %p167
        %p289 = pneg %p191
        %p290 = pneg %p188
        %p291 = pneg %p217
        %p292 = pneg %p214
        %s293 = sand.u32 %s204, 1
        %s294 = scalar_lea.sflag [#allocation4], %s293
        %s295 = sand.u32 %s204, 1
        %s296 = smul.addr %s295, 8
        %s297 = scalar_lea.vmem [#allocation3], %s296
        %p298 = scmp.lt.s32.totalorder %s23, 1
        %s299 = scalar_select %p298, %s23, 1
        %s300 = smul.addr %s299, 8
        %s301 = scalar_lea.vmem %s0, %s300
        %v302 = vld [vmem:[%s301] sm:$0xff]
        %vm303 = vcmask 261120
        %v304 = vsel %vm303, %v302, 0.0
        %305 = vadd.xlane.f32.xlu0 %v304
        %v306 = vpop.xlane.xlu0 %305
        %v307 = vmul.f32 %v302, %v302
        %v308 = vsel %vm303, %v307, 0.0
        %309 = vadd.xlane.f32.xlu0 %v308
        %v310 = vpop.xlane.xlu0 %309
        %v311 = vmul.f32 %v306, 0.03125
        %v312 = vmul.f32 %v310, 0.03125
        %v313 = vmul.f32 %v311, %v311
        %v314 = vsub.f32 %v312, %v313
        %v315 = vmax.f32 %v314, 0.0
        %v316 = vadd.f32 %v315, 1e-05
        %v317 = vrsqrt.pop %v316
        %v318 = vsub.f32 %v302, %v311
        %v319 = vmul.f32 %v318, %v317
        %v320 = vld [vmem:[%s1] sm:$0x1]
        %v322 = vlaneseq
        %v323 = vshrl.u32 %v322, 7
        %v324 = vsub.s32 0, %v323
        %v325 = vrot.slane %v320, %v324
        %v327 = vmul.f32 %v319, %v325
        %v328 = vld [vmem:[%s2] sm:$0x1]
        %v330 = vlaneseq
        %v331 = vshrl.u32 %v330, 7
        %v332 = vsub.s32 0, %v331
        %v333 = vrot.slane %v328, %v332
        %v335 = vadd.f32 %v327, %v333
        %v336 = vld [vmem:[%s3] sm:$0xff]
        %v337 = vld [vmem:[%s3 + $0x8] sm:$0xff]
        %v338 = vld [vmem:[%s3 + $0x10] sm:$0xff]
        %v339 = vld [vmem:[%s3 + $0x18] sm:$0xff]
        %v340 = vld [vmem:[%s4] sm:$0x1]
        %v342 = vlaneseq
        %v343 = vshrl.u32 %v342, 7
        %v344 = vsub.s32 0, %v343
        %v345 = vrot.slane %v340, %v344
        %v348 = vsel %vm303, %v335, 0
        %350 = vmatprep.subr.mxu0 0.0
        %351 = vmatpush1.msra.mxu0 %v336
        %352 = vmatprep.subr.mxu0 0.0
        %353 = vmatpush1.msra.mxu0 %v337
        %354 = vmatprep.subr.mxu0 0.0
        %355 = vmatpush1.msra.mxu0 %v338
        %356 = vmatprep.subr.mxu0 0.0
        %357 = vmatpush1.msra.mxu0 %v339
        %358 = vmatprep.subr.mxu0 0.0
        %359 = vmatpush1.msra.mxu0 0.0
        %360 = vmatprep.subr.mxu0 0.0
        %361 = vmatpush1.msra.mxu0 0.0
        %362 = vmatprep.subr.mxu0 0.0
        %363 = vmatpush1.msra.mxu0 0.0
        %364 = vmatprep.subr.mxu0 0.0
        %365 = vmatpush1.msra.mxu0 0.0
        %366 = vmatprep.subr.mxu0 0.0
        %367 = vmatpush1.msra.mxu0 0.0
        %368 = vmatprep.subr.mxu0 0.0
        %369 = vmatpush1.msra.mxu0 0.0
        %370 = vmatprep.subr.mxu0 0.0
        %371 = vmatpush1.msra.mxu0 0.0
        %372 = vmatprep.subr.mxu0 0.0
        %373 = vmatpush1.msra.mxu0 0.0
        %374 = vmatprep.subr.mxu0 0.0
        %375 = vmatpush1.msra.mxu0 0.0
        %376 = vmatprep.subr.mxu0 0.0
        %377 = vmatpush1.msra.mxu0 0.0
        %378 = vmatprep.subr.mxu0 0.0
        %379 = vmatpush1.msra.mxu0 0.0
        %380 = vmatprep.subr.mxu0 0.0
        %381 = vmatpush1.msra.mxu0 0.0
        %382 = vmatprep.subr.mxu0 0.0
        %383 = vmatpush1.msra.mxu0 0.0
        %384 = vmatprep.subr.mxu0 0.0
        %385 = vmatpush1.msra.mxu0 0.0
        %386 = vmatprep.subr.mxu0 0.0
        %387 = vmatpush1.msra.mxu0 0.0
        %388 = vmatprep.subr.mxu0 0.0
        %389 = vmatpush1.msra.mxu0 0.0
        %390 = vmatprep.subr.mxu0 0.0
        %391 = vmatpush1.msra.mxu0 0.0
        %392 = vmatprep.subr.mxu0 0.0
        %393 = vmatpush1.msra.mxu0 0.0
        %394 = vmatprep.subr.mxu0 0.0
        %395 = vmatpush1.msra.mxu0 0.0
        %396 = vmatprep.subr.mxu0 0.0
        %397 = vmatpush1.msra.mxu0 0.0
        %398 = vmatprep.subr.mxu0 0.0
        %399 = vmatpush1.msra.mxu0 0.0
        %400 = vmatprep.subr.mxu0 0.0
        %401 = vmatpush1.msra.mxu0 0.0
        %402 = vmatprep.subr.mxu0 0.0
        %403 = vmatpush1.msra.mxu0 0.0
        %404 = vmatprep.subr.mxu0 0.0
        %405 = vmatpush1.msra.mxu0 0.0
        %406 = vmatprep.subr.mxu0 0.0
        %407 = vmatpush1.msra.mxu0 0.0
        %408 = vmatprep.subr.mxu0 0.0
        %409 = vmatpush1.msra.mxu0 0.0
        %410 = vmatprep.subr.mxu0 0.0
        %411 = vmatpush1.msra.mxu0 0.0
        %412 = vmatprep.subr.mxu0 0.0
        %413 = vmatpush1.msra.mxu0 0.0
        %414 = vmatprep.mubr.f32.mxu0 0.0
        %415 = vmatmul.mubr.f32.gmra.mrb[0].mxu0 %v348
        %v416 = vpop.f32.mrb[0].mxu0
        %v417 = vadd.f32 %v345, %v416
        %v418 = vpop.f32.mrb[0].mxu0
        %419 = vdwg.mxu0
        %v420 = vmax.f32 %v417, 0.0
        %s421 = sld [smem:[#allocation2]]
        %v422 = vstv %s421
        %v423 = vmul.f32 %v420, %v422
        %v424 = vld [vmem:[%s5] sm:$0xff]
        %v425 = vld [vmem:[%s5 + $0x8] sm:$0xff]
        %v426 = vld [vmem:[%s5 + $0x10] sm:$0xff]
        %v427 = vld [vmem:[%s5 + $0x18] sm:$0xff]
        %v428 = vld [vmem:[%s5 + $0x20] sm:$0xff]
        %v429 = vld [vmem:[%s5 + $0x28] sm:$0xff]
        %v430 = vld [vmem:[%s5 + $0x30] sm:$0xff]
        %v431 = vld [vmem:[%s5 + $0x38] sm:$0xff]
        %v432 = vld [vmem:[%s5 + $0x40] sm:$0xff]
        %v433 = vld [vmem:[%s5 + $0x48] sm:$0xff]
        %v434 = vld [vmem:[%s5 + $0x50] sm:$0xff]
        %v435 = vld [vmem:[%s5 + $0x58] sm:$0xff]
        %v436 = vld [vmem:[%s5 + $0x60] sm:$0xff]
        %v437 = vld [vmem:[%s5 + $0x68] sm:$0xff]
        %v438 = vld [vmem:[%s5 + $0x70] sm:$0xff]
        %v439 = vld [vmem:[%s5 + $0x78] sm:$0xff]
        %v440 = vld [vmem:[%s6] sm:$0x1]
        %v442 = vlaneseq
        %v443 = vshrl.u32 %v442, 7
        %v444 = vsub.s32 0, %v443
        %v445 = vrot.slane %v440, %v444
        %447 = vmatprep.subr.mxu0 0.0
        %448 = vmatpush1.msra.mxu0 %v424
        %449 = vmatprep.subr.mxu0 0.0
        %450 = vmatpush1.msra.mxu0 %v425
        %451 = vmatprep.subr.mxu0 0.0
        %452 = vmatpush1.msra.mxu0 %v426
        %453 = vmatprep.subr.mxu0 0.0
        %454 = vmatpush1.msra.mxu0 %v427
        %455 = vmatprep.subr.mxu0 0.0
        %456 = vmatpush1.msra.mxu0 %v428
        %457 = vmatprep.subr.mxu0 0.0
        %458 = vmatpush1.msra.mxu0 %v429
        %459 = vmatprep.subr.mxu0 0.0
        %460 = vmatpush1.msra.mxu0 %v430
        %461 = vmatprep.subr.mxu0 0.0
        %462 = vmatpush1.msra.mxu0 %v431
        %463 = vmatprep.subr.mxu0 0.0
        %464 = vmatpush1.msra.mxu0 %v432
        %465 = vmatprep.subr.mxu0 0.0
        %466 = vmatpush1.msra.mxu0 %v433
        %467 = vmatprep.subr.mxu0 0.0
        %468 = vmatpush1.msra.mxu0 %v434
        %469 = vmatprep.subr.mxu0 0.0
        %470 = vmatpush1.msra.mxu0 %v435
        %471 = vmatprep.subr.mxu0 0.0
        %472 = vmatpush1.msra.mxu0 %v436
        %473 = vmatprep.subr.mxu0 0.0
        %474 = vmatpush1.msra.mxu0 %v437
        %475 = vmatprep.subr.mxu0 0.0
        %476 = vmatpush1.msra.mxu0 %v438
        %477 = vmatprep.subr.mxu0 0.0
        %478 = vmatpush1.msra.mxu0 %v439
        %479 = vmatprep.subr.mxu0 0.0
        %480 = vmatpush1.msra.mxu0 0.0
        %481 = vmatprep.subr.mxu0 0.0
        %482 = vmatpush1.msra.mxu0 0.0
        %483 = vmatprep.subr.mxu0 0.0
        %484 = vmatpush1.msra.mxu0 0.0
        %485 = vmatprep.subr.mxu0 0.0
        %486 = vmatpush1.msra.mxu0 0.0
        %487 = vmatprep.subr.mxu0 0.0
        %488 = vmatpush1.msra.mxu0 0.0
        %489 = vmatprep.subr.mxu0 0.0
        %490 = vmatpush1.msra.mxu0 0.0
        %491 = vmatprep.subr.mxu0 0.0
        %492 = vmatpush1.msra.mxu0 0.0
        %493 = vmatprep.subr.mxu0 0.0
        %494 = vmatpush1.msra.mxu0 0.0
        %495 = vmatprep.subr.mxu0 0.0
        %496 = vmatpush1.msra.mxu0 0.0
        %497 = vmatprep.subr.mxu0 0.0
        %498 = vmatpush1.msra.mxu0 0.0
        %499 = vmatprep.subr.mxu0 0.0
        %500 = vmatpush1.msra.mxu0 0.0
        %501 = vmatprep.subr.mxu0 0.0
        %502 = vmatpush1.msra.mxu0 0.0
        %503 = vmatprep.subr.mxu0 0.0
        %504 = vmatpush1.msra.mxu0 0.0
        %505 = vmatprep.subr.mxu0 0.0
        %506 = vmatpush1.msra.mxu0 0.0
        %507 = vmatprep.subr.mxu0 0.0
        %508 = vmatpush1.msra.mxu0 0.0
        %509 = vmatprep.subr.mxu0 0.0
        %510 = vmatpush1.msra.mxu0 0.0
        %511 = vmatprep.mubr.f32.mxu0 0.0
        %512 = vmatmul.mubr.f32.gmra.mrb[0].mxu0 %v423
        %v513 = vpop.f32.mrb[0].mxu0
        %v514 = vadd.f32 %v445, %v513
        %v515 = vpop.f32.mrb[0].mxu0
        %516 = vdwg.mxu0
        %517 = vst.msk [vmem:[%s297] sm:$0xff] %vm303, %v514
        %s518 = sand.u32 %s204, 1
        %s519 = scalar_lea.sflag [#allocation4], %s518
        %s520 = sand.u32 %s204, 1
        %s521 = smul.addr %s520, 8
        %s522 = scalar_lea.vmem [#allocation3], %s521
        // Predicated region
        $region53: #{tpu_custom_call.1} parent=51 // pred_check
          %p523 = pneg %p214
        $region54: #{tpu_custom_call.1} parent=51 // pred_check_branch
          %525 = sbr.rel (%p523) target = $region56
        $region55: #{tpu_custom_call.1} parent=51 // pred_region
          %s527 = ssub.s32 128, 128
          %528 = vsyncadd %s519, %s527
          %s529 = smul.addr %s23, 128
          %s530 = scalar_lea.hbm %s8, %s529
          %s532 = sshll.u32 %s522, 4
          %s533 = int_to_ptr.vmem [resolvable:$true] %s532
          %535 = dma.vmem_to_hbm [thread:$0]  %s533, 128, %s530, %s519
        $region56: #{tpu_custom_call.1} parent=51 // pred_fallthru
          _
      $region52: #{tpu_custom_call.1} parent=5 // pred_fallthru
        _
      %p536 = scmp.le.s32.totalorder 2, %s18
      // Predicated region
      $region57: #{tpu_custom_call.1} parent=5 // pred_check
        %p537 = pneg %p536
      $region58: #{tpu_custom_call.1} parent=5 // pred_check_branch
        %539 = sbr.rel (%p537) target = $region60
      $region59: #{tpu_custom_call.1} parent=5 // pred_region
        %s540 = ssub.s32 %s18, 2
        // Predicated region
        $region61: #{tpu_custom_call.1} parent=59 // pred_check
          %p541 = pneg %p220
        $region62: #{tpu_custom_call.1} parent=59 // pred_check_branch
          %543 = sbr.rel (%p541) target = $region64
        $region63: #{tpu_custom_call.1} parent=59 // pred_region
          %s544 = sand.u32 %s205, 1
          %s545 = scalar_lea.sflag [#allocation4], %s544
          %s546 = sand.u32 %s205, 1
          %s547 = smul.addr %s546, 8
          %s548 = scalar_lea.vmem [#allocation3], %s547
          %549 = dma.done %s545, 128
        $region64: #{tpu_custom_call.1} parent=59 // pred_fallthru
          _
      $region60: #{tpu_custom_call.1} parent=5 // pred_fallthru
        _
    $region6: #{tpu_custom_call.1} parent=1 // loop_footer
      %s22 = sadd.s32 1, %s18
    $region7: #{tpu_custom_call.1} parent=1 // loop_footer_branch
      %17 = sbr.rel target = $region3
    $region8: #{tpu_custom_call.1} parent=1 // loop_exit
      _
    %550 = vsyncpa [#allocation4], 1
    %s551 = scalar_lea.sflag [#allocation4], 1
    %552 = vsyncpa %s551, 1

</llo_original>
